<compile_context>
chip_gen: v7x
topology: tpu7x:2x2x1
jax: 0.10.0
libtpu: 0.0.40
codegen_flags: <defaults>
</compile_context>

<pallas_src>
import math
import jax
import jax.numpy as jnp
from jax.experimental import pallas as pl
from jax.experimental.pallas import tpu as pltpu


def _seq_tile(s, pref=256):
    """Largest convenient sequence tile (full seq for small S, 256 otherwise)."""
    if s <= pref:
        return s
    if s % pref == 0:
        return pref
    return s


# ----------------------------- projection kernels ---------------------------

def _proj_q_kernel(x_ref, w_ref, b_ref, o_ref):
    # x_ref: (1, S_t, Win)  w_ref: (Win, Wout)  b_ref: (1, Wout)  o_ref: (1, S_t, Wout)
    x = x_ref[0].astype(jnp.bfloat16)
    w = w_ref[...].astype(jnp.bfloat16)
    y = jnp.dot(x, w, preferred_element_type=jnp.float32) + b_ref[...]
    o_ref[0] = y.astype(o_ref.dtype)


def _proj_kv_kernel(x_ref, w_ref, b_ref, k_ref, v_ref):
    # Packed K/V projection: w_ref: (Win, 2*Wout), writes two outputs.
    wout = k_ref.shape[-1]
    x = x_ref[0].astype(jnp.bfloat16)
    w = w_ref[...].astype(jnp.bfloat16)
    y = jnp.dot(x, w, preferred_element_type=jnp.float32) + b_ref[...]
    k_ref[0] = y[:, :wout].astype(k_ref.dtype)
    v_ref[0] = y[:, wout:].astype(v_ref.dtype)


def project_q(x, w, b, out_dtype=jnp.bfloat16):
    B, S, Win = x.shape
    Wout = w.shape[1]
    st = _seq_tile(S)
    return pl.pallas_call(
        _proj_q_kernel,
        out_shape=jax.ShapeDtypeStruct((B, S, Wout), out_dtype),
        grid=(B, S // st),
        in_specs=[
            pl.BlockSpec((1, st, Win), lambda b_, s_: (b_, s_, 0)),
            pl.BlockSpec((Win, Wout), lambda b_, s_: (0, 0)),   # weight resident
            pl.BlockSpec((1, Wout), lambda b_, s_: (0, 0)),
        ],
        out_specs=pl.BlockSpec((1, st, Wout), lambda b_, s_: (b_, s_, 0)),
        compiler_params=pltpu.CompilerParams(
            dimension_semantics=("parallel", "parallel")),
    )(x, w, b.reshape(1, Wout))


def project_kv(x, w_packed, b_packed, out_dtype=jnp.bfloat16):
    B, S, Win = x.shape
    Wout2 = w_packed.shape[1]
    Wout = Wout2 // 2
    st = _seq_tile(S)
    return pl.pallas_call(
        _proj_kv_kernel,
        out_shape=(jax.ShapeDtypeStruct((B, S, Wout), out_dtype),
                   jax.ShapeDtypeStruct((B, S, Wout), out_dtype)),
        grid=(B, S // st),
        in_specs=[
            pl.BlockSpec((1, st, Win), lambda b_, s_: (b_, s_, 0)),
            pl.BlockSpec((Win, Wout2), lambda b_, s_: (0, 0)),   # packed weight resident
            pl.BlockSpec((1, Wout2), lambda b_, s_: (0, 0)),
        ],
        out_specs=(pl.BlockSpec((1, st, Wout), lambda b_, s_: (b_, s_, 0)),
                   pl.BlockSpec((1, st, Wout), lambda b_, s_: (b_, s_, 0))),
        compiler_params=pltpu.CompilerParams(
            dimension_semantics=("parallel", "parallel")),
    )(x, w_packed, b_packed.reshape(1, Wout2))


# ------------------------------ attention kernel ----------------------------

def _make_attn_kernel(num_heads, head_dim, inv_dk, has_mask):
    def kernel(*refs):
        if has_mask:
            q_ref, k_ref, v_ref, mask_ref, o_ref = refs
        else:
            q_ref, k_ref, v_ref, o_ref = refs

        sf = q_ref.shape[1]
        st = k_ref.shape[1]

        # bf16 inputs, head-split without any HBM round trip.
        q = (q_ref[0] * inv_dk).reshape(sf, num_heads, head_dim)   # scale folded into q
        k = k_ref[0].reshape(st, num_heads, head_dim)
        v = v_ref[0].reshape(st, num_heads, head_dim)

        # Batched-over-heads score matmul, f32 accumulation on the MXU.
        scores = jnp.einsum('fhd,thd->hft', q, k,
                            preferred_element_type=jnp.float32)    # (H, Sf, St)
        if has_mask:
            bias = (1.0 - mask_ref[0]) * -10000.0                  # (Sf, St)
            scores = scores + bias[None, :, :]

        # Numerically-stable softmax (f32); divide moved to EUP reciprocal.
        m = jnp.max(scores, axis=-1, keepdims=True)
        p = jnp.exp(scores - m)
        denom = jnp.sum(p, axis=-1, keepdims=True)
        p = p * pl.reciprocal(denom, approx=True)

        ctx = jnp.einsum('hft,thd->fhd', p.astype(jnp.bfloat16), v,
                         preferred_element_type=jnp.float32)       # (Sf, H, Dh)
        # Lane-dense output store: (Sf, W) = (Sf, H*Dh).
        o_ref[0] = ctx.reshape(sf, num_heads * head_dim).astype(o_ref.dtype)

    return kernel


def multi_head_attention(q, k, v, mask, num_heads, dk_sqrt, out_dtype):
    """q: [B, Sf, W] bf16, k/v: [B, St, W] bf16, mask: [B, Sf, St] or None."""
    B, Sf, W = q.shape
    St = k.shape[1]
    head_dim = W // num_heads
    sf_t = _seq_tile(Sf)
    has_mask = mask is not None

    in_specs = [
        pl.BlockSpec((1, sf_t, W), lambda b_, s_: (b_, s_, 0)),
        pl.BlockSpec((1, St, W), lambda b_, s_: (b_, 0, 0)),
        pl.BlockSpec((1, St, W), lambda b_, s_: (b_, 0, 0)),
    ]
    args = [q, k, v]
    if has_mask:
        in_specs.append(pl.BlockSpec((1, sf_t, St), lambda b_, s_: (b_, s_, 0)))
        args.append(mask.astype(jnp.float32))

    kernel = _make_attn_kernel(num_heads, head_dim, 1.0 / dk_sqrt, has_mask)
    return pl.pallas_call(
        kernel,
        out_shape=jax.ShapeDtypeStruct((B, Sf, W), out_dtype),
        grid=(B, Sf // sf_t),
        in_specs=in_specs,
        out_specs=pl.BlockSpec((1, sf_t, W), lambda b_, s_: (b_, s_, 0)),
        compiler_params=pltpu.CompilerParams(
            dimension_semantics=("parallel", "parallel")),
    )(*args)


# ------------------------------ module wrapper -------------------------------

class MultiHeadAttentionPallas:
    def __init__(self, width, num_attention_heads, key):
        assert width % num_attention_heads == 0
        self.width = width
        self.num_heads = num_attention_heads
        self.head_size = width // num_attention_heads
        self.dk_sqrt = math.sqrt(self.head_size)

        bound = 1.0 / math.sqrt(width)
        ks = jax.random.split(key, 6)
        u = lambda k_, shape: jax.random.uniform(
            k_, shape, dtype=jnp.float32, minval=-bound, maxval=bound)
        # Pre-transposed [in, out] (PyTorch stores [out, in]).
        self.wq, self.bq = u(ks[0], (width, width)), u(ks[1], (width,))
        self.wk, self.bk = u(ks[2], (width, width)), u(ks[3], (width,))
        self.wv, self.bv = u(ks[4], (width, width)), u(ks[5], (width,))
        # Packed K/V projection weight [W, 2W] for the fused projection kernel.
        self.w_kv = jnp.concatenate([self.wk, self.wv], axis=1)
        self.b_kv = jnp.concatenate([self.bk, self.bv], axis=0)

    def __call__(self, from_tensor, to_tensor, to_mask=None):
        q = project_q(from_tensor, self.wq, self.bq)          # [B, Sf, W] bf16
        k, v = project_kv(to_tensor, self.w_kv, self.b_kv)    # [B, St, W] bf16 each
        return multi_head_attention(q, k, v, to_mask, self.num_heads,
                                    self.dk_sqrt, from_tensor.dtype)


# ----------------------------- pure-JAX reference ----------------------------

def reference_forward(mod, from_tensor, to_tensor, to_mask=None):
    B, Sf, _ = from_tensor.shape
    St = to_tensor.shape[1]
    q = from_tensor @ mod.wq + mod.bq
    k = to_tensor @ mod.wk + mod.bk
    v = to_tensor @ mod.wv + mod.bv
    split = lambda x, S: x.reshape(B, S, mod.num_heads, mod.head_size).transpose(0, 2, 1, 3)
    q, k, v = split(q, Sf), split(k, St), split(v, St)
    scores = jnp.einsum("bhqd,bhkd->bhqk", q, k) / mod.dk_sqrt
    if to_mask is not None:
        scores = scores + (1.0 - to_mask[:, None]) * -10000.0
    probs = jax.nn.softmax(scores, axis=-1)
    ctx = jnp.einsum("bhqk,bhkd->bhqd", probs, v)
    return ctx.transpose(0, 2, 1, 3).reshape(B, Sf, mod.width)


# ------------------------------------ main -----------------------------------

if __name__ == "__main__":
    # Small shapes consistent with the module (BERT-style attention).
    batch = 2
    from_seq = 8
    to_seq = 8
    width = 32
    num_heads = 4

    key = jax.random.PRNGKey(0)
    kp, kf, kt, km = jax.random.split(key, 4)

    mod = MultiHeadAttentionPallas(width, num_heads, kp)

    from_tensor = jax.random.normal(kf, (batch, from_seq, width), dtype=jnp.float32)
    to_tensor = jax.random.normal(kt, (batch, to_seq, width), dtype=jnp.float32)
    # Binary attention mask [B, Sf, St] (1 = attend, 0 = masked).
    to_mask = (jax.random.uniform(km, (batch, from_seq, to_seq)) > 0.2).astype(jnp.float32)

    # Masked path.
    out = jax.block_until_ready(mod(from_tensor, to_tensor, to_mask))
    ref = reference_forward(mod, from_tensor, to_tensor, to_mask)
    assert out.shape == (batch, from_seq, width)
    # bf16 MXU inputs -> compare against the f32 reference with a loosened tolerance.
    assert jnp.allclose(out, ref, atol=5e-2, rtol=5e-2)

    # No-mask path (mask add skipped entirely inside the kernel).
    out_nm = jax.block_until_ready(mod(from_tensor, to_tensor, None))
    ref_nm = reference_forward(mod, from_tensor, to_tensor, None)
    assert jnp.allclose(out_nm, ref_nm, atol=5e-2, rtol=5e-2)

    print("KERNEL_OK")
</pallas_src>

<mosaic_0001>
module attributes {stable_mosaic.version = 11 : i64} {
  func.func @_proj_q_kernel(%arg0: i32, %arg1: i32, %arg2: memref<1x8x32xf32, #tpu.memory_space<vmem>>, %arg3: memref<32x32xf32, #tpu.memory_space<vmem>>, %arg4: memref<1x32xf32, #tpu.memory_space<vmem>>, %arg5: memref<1x8x32xbf16, #tpu.memory_space<vmem>>) attributes {dimension_semantics = [#tpu.dimension_semantics<parallel>, #tpu.dimension_semantics<parallel>], iteration_bounds = array<i64: 2, 1>, scalar_prefetch = 0 : i64, scratch_operands = 0 : i64, tpu.core_type = #tpu.core_type<tc>, window_params = [{transform_indices = @transform_0, window_bounds = array<i64: 1, 8, 32>}, {pipeline_mode = #tpu.pipeline_mode<synchronous>, transform_indices = @transform_1, window_bounds = array<i64: 32, 32>}, {pipeline_mode = #tpu.pipeline_mode<synchronous>, transform_indices = @transform_2, window_bounds = array<i64: 1, 32>}, {transform_indices = @transform_3, window_bounds = array<i64: 1, 8, 32>}]} {
    %c0 = arith.constant 0 : index
    %c0_0 = arith.constant 0 : index
    %c0_1 = arith.constant 0 : index
    %0 = vector.load %arg2[%c0, %c0_0, %c0_1] : memref<1x8x32xf32, #tpu.memory_space<vmem>>, vector<1x8x32xf32>
    %1 = vector.shape_cast %0 : vector<1x8x32xf32> to vector<8x32xf32>
    %2 = arith.truncf %1 : vector<8x32xf32> to vector<8x32xbf16>
    %c0_2 = arith.constant 0 : index
    %c0_3 = arith.constant 0 : index
    %3 = vector.load %arg3[%c0_2, %c0_3] : memref<32x32xf32, #tpu.memory_space<vmem>>, vector<32x32xf32>
    %4 = arith.truncf %3 : vector<32x32xf32> to vector<32x32xbf16>
    %cst = arith.constant dense<0.000000e+00> : vector<8x32xf32>
    %5 = tpu.matmul %2, %4, %cst {dimension_numbers = #tpu.dot_dimension_numbers<[1], [0], [0], [1], [0, 0, 1, 1], [], []>} : vector<8x32xbf16>, vector<32x32xbf16>, vector<8x32xf32> -> vector<8x32xf32>
    %c0_4 = arith.constant 0 : index
    %c0_5 = arith.constant 0 : index
    %6 = vector.load %arg4[%c0_4, %c0_5] : memref<1x32xf32, #tpu.memory_space<vmem>>, vector<1x32xf32>
    %7 = vector.broadcast %6 : vector<1x32xf32> to vector<8x32xf32>
    %8 = arith.addf %5, %7 : vector<8x32xf32>
    %9 = arith.truncf %8 : vector<8x32xf32> to vector<8x32xbf16>
    %c0_6 = arith.constant 0 : index
    %c0_7 = arith.constant 0 : index
    %c0_8 = arith.constant 0 : index
    %10 = vector.load %arg5[%c0_6, %c0_7, %c0_8] : memref<1x8x32xbf16, #tpu.memory_space<vmem>>, vector<1x8x32xbf16>
    %11 = vector.shape_cast %10 : vector<1x8x32xbf16> to vector<8x32xbf16>
    %12 = vector.shape_cast %9 : vector<8x32xbf16> to vector<1x8x32xbf16>
    tpu.vector_store %arg5[%c0_6, %c0_7, %c0_8], %12 {strides = array<i32>} : memref<1x8x32xbf16, #tpu.memory_space<vmem>>, vector<1x8x32xbf16>,
    return
  }
  func.func @transform_0(%arg0: i32, %arg1: i32) -> (i32, i32, i32) {
    %c0_i32 = arith.constant 0 : i32
    %c0_i32_0 = arith.constant 0 : i32
    return %arg0, %arg1, %c0_i32 : i32, i32, i32
  }
  func.func @transform_1(%arg0: i32, %arg1: i32) -> (i32, i32) {
    %c0_i32 = arith.constant 0 : i32
    %c0_i32_0 = arith.constant 0 : i32
    %c0_i32_1 = arith.constant 0 : i32
    return %c0_i32, %c0_i32_0 : i32, i32
  }
  func.func @transform_2(%arg0: i32, %arg1: i32) -> (i32, i32) {
    %c0_i32 = arith.constant 0 : i32
    %c0_i32_0 = arith.constant 0 : i32
    %c0_i32_1 = arith.constant 0 : i32
    return %c0_i32, %c0_i32_0 : i32, i32
  }
  func.func @transform_3(%arg0: i32, %arg1: i32) -> (i32, i32, i32) {
    %c0_i32 = arith.constant 0 : i32
    %c0_i32_0 = arith.constant 0 : i32
    return %arg0, %arg1, %c0_i32 : i32, i32, i32
  }
}

</mosaic_0001>

<llo_original>
// kernel: tpu_custom_call.1
$region0: #{tpu_custom_call.1}
  #allocation0 [shape = 'u32[]', space=smem, size = 0x4, offset = 0x4, fixed_abs, tag = 'smem constant byte address 0x4 - core index']
  #allocation1 [shape = 'u32[144,128]{1,0:T(1,128)}', space=vmem, size = 0x12000, scoped, tag = 'internal scratch']
  %s0 = inlined_call_operand.hbm [shape: f32[2,8,32], index: 0, kind: input, shape index: {}]
  %s1 = inlined_call_operand.hbm [shape: f32[32,32], index: 1, kind: input, shape index: {}]
  %s2 = inlined_call_operand.vmem [shape: f32[1,32], index: 2, kind: input, shape index: {}]
  %s3 = inlined_call_operand.hbm [shape: bf16[2,8,32], index: 3, kind: output, shape index: {}]
  %s4 = sld [smem:[#allocation0]]
  $region53: #{tpu_custom_call.1} parent=0
    _
  %s6 = ssub.s32 1, %s4
  %s7 = scalar_select 0, %s6, %s4
  $region1: #{tpu_custom_call.1} parent=0
    #allocation2 [shape = 'u8[8192]{0}', space=vmem, size = 0x2000, scoped, tag = 'input window, operand 0']
    #allocation3 [shape = 's32[2]{0}', space=sflag, size = 0x8, scoped, tag = 'scoped memory for tpu_custom_call.1']
    #allocation4 [shape = 's32[2]{0}', space=sflag, size = 0x8, scoped, tag = 'scoped memory for tpu_custom_call.1']
    #allocation5 [shape = 'u8[16384]{0}', space=vmem, size = 0x4000, scoped, tag = 'input window, operand 1, single buffered']
    #allocation6 [shape = 's32[1]{0}', space=sflag, size = 0x4, scoped, tag = 'scoped memory for tpu_custom_call.1']
    #allocation7 [shape = 'u8[4096]{0}', space=vmem, size = 0x1000, scoped, tag = 'output window, operand 0']
    %8 = vsyncpa [#allocation3], 0
    %s9 = scalar_lea.sflag [#allocation3], 1
    %10 = vsyncpa %s9, 0
    %11 = vsyncpa [#allocation6], 0
    %12 = vsyncpa [#allocation4], 0
    %s13 = scalar_lea.sflag [#allocation4], 1
    %14 = vsyncpa %s13, 0
    loop: start=0, step=1, limit=4
    $region2: #{tpu_custom_call.1} parent=1 // loop_pre_header
      _
    $region3: #{tpu_custom_call.1} parent=1 // loop_header
      %s16 = sphi 0, %s20
      %p17 = scmp.ge.s32.totalorder %s16, 4
      %s23 = sphi 0, %s35
      %s24 = sphi 0, %s31
      %s25 = sphi 0, %s23
      %s26 = sphi 0, %s24
      %s27 = sphi 0, %s25
      %s28 = sphi 0, %s26
      %s40 = sphi 0, %s42
      %s43 = sphi 0, %s40
      %s44 = sphi 0, %s43
      %s60 = sphi 0, %s44
      %s64 = sphi 0, %s64
      %s66 = sphi 0, %s64
      %s67 = sphi 0, %s66
      %s81 = sphi 0, %s67
      %s85 = sphi 0, %s85
      %s87 = sphi 0, %s85
      %s88 = sphi 0, %s87
      %s102 = sphi 0, %s88
      %s110 = sphi 0, %s112
      %s113 = sphi 0, %s110
      %s114 = sphi 0, %s113
      %s130 = sphi 0, %s114
    $region4: #{tpu_custom_call.1} parent=1 // loop_header_branch
      %19 = sbr.rel (%p17) target = $region8
    $region5: #{tpu_custom_call.1} parent=1 // loop_body
      %s21 = ssub.s32 %s16, 1
      %s22 = ssub.s32 %s16, 2
      %s29 = sadd.s32 1, %s24
      %p30 = scmp.ge.s32.totalorder %s29, 1
      %s31 = scalar_select %p30, 0, %s29
      %s32 = sadd.s32 1, %s23
      %s33 = scalar_select %p30, %s32, %s23
      %p34 = scmp.ge.s32.totalorder %s33, 2
      %s35 = scalar_select %p34, 0, %s33
      %s36 = ssub.s32 %s23, %s35
      %s37 = ssub.s32 %s24, %s31
      %s38 = sor.u32 %s36, %s37
      %p39 = scmp.eq.s32.totalorder %s38, 0
      %s41 = sadd.s32 %s40, 1
      %s42 = scalar_select %p39, %s40, %s41
      %p45 = pneg %p39
      %p46 = scmp.eq.s32.totalorder %s16, 1
      %p47 = por %p45, %p46
      %p48 = scmp.ne.s32.totalorder %s40, %s43
      %p49 = scmp.eq.s32.totalorder %s16, 0
      %p50 = por %p48, %p49
      %p51 = scmp.ne.s32.totalorder %s40, %s43
      %p52 = scmp.eq.s32.totalorder %s21, 1
      %p53 = por %p51, %p52
      %p54 = scmp.ne.s32.totalorder %s43, %s44
      %p55 = scmp.eq.s32.totalorder %s21, 0
      %p56 = por %p54, %p55
      %p57 = scmp.ne.s32.totalorder %s43, %s44
      %p58 = scmp.eq.s32.totalorder %s22, 1
      %p59 = por %p57, %p58
      %p61 = scmp.ne.s32.totalorder %s44, %s60
      %p62 = scmp.eq.s32.totalorder %s22, 0
      %p63 = por %p61, %p62
      %s65 = sadd.s32 %s64, 1
      %p68 = scmp.eq.s32.totalorder %s16, 1
      %p69 = scmp.ne.s32.totalorder %s64, %s66
      %p70 = scmp.eq.s32.totalorder %s16, 0
      %p71 = por %p69, %p70
      %p72 = scmp.ne.s32.totalorder %s64, %s66
      %p73 = scmp.eq.s32.totalorder %s21, 1
      %p74 = por %p72, %p73
      %p75 = scmp.ne.s32.totalorder %s66, %s67
      %p76 = scmp.eq.s32.totalorder %s21, 0
      %p77 = por %p75, %p76
      %p78 = scmp.ne.s32.totalorder %s66, %s67
      %p79 = scmp.eq.s32.totalorder %s22, 1
      %p80 = por %p78, %p79
      %p82 = scmp.ne.s32.totalorder %s67, %s81
      %p83 = scmp.eq.s32.totalorder %s22, 0
      %p84 = por %p82, %p83
      %s86 = sadd.s32 %s85, 1
      %p89 = scmp.eq.s32.totalorder %s16, 1
      %p90 = scmp.ne.s32.totalorder %s85, %s87
      %p91 = scmp.eq.s32.totalorder %s16, 0
      %p92 = por %p90, %p91
      %p93 = scmp.ne.s32.totalorder %s85, %s87
      %p94 = scmp.eq.s32.totalorder %s21, 1
      %p95 = por %p93, %p94
      %p96 = scmp.ne.s32.totalorder %s87, %s88
      %p97 = scmp.eq.s32.totalorder %s21, 0
      %p98 = por %p96, %p97
      %p99 = scmp.ne.s32.totalorder %s87, %s88
      %p100 = scmp.eq.s32.totalorder %s22, 1
      %p101 = por %p99, %p100
      %p103 = scmp.ne.s32.totalorder %s88, %s102
      %p104 = scmp.eq.s32.totalorder %s22, 0
      %p105 = por %p103, %p104
      %s106 = ssub.s32 %s23, %s35
      %s107 = ssub.s32 %s24, %s31
      %s108 = sor.u32 %s106, %s107
      %p109 = scmp.eq.s32.totalorder %s108, 0
      %s111 = sadd.s32 %s110, 1
      %s112 = scalar_select %p109, %s110, %s111
      %p115 = pneg %p109
      %p116 = scmp.eq.s32.totalorder %s16, 1
      %p117 = por %p115, %p116
      %p118 = scmp.ne.s32.totalorder %s110, %s113
      %p119 = scmp.eq.s32.totalorder %s16, 0
      %p120 = por %p118, %p119
      %p121 = scmp.ne.s32.totalorder %s110, %s113
      %p122 = scmp.eq.s32.totalorder %s21, 1
      %p123 = por %p121, %p122
      %p124 = scmp.ne.s32.totalorder %s113, %s114
      %p125 = scmp.eq.s32.totalorder %s21, 0
      %p126 = por %p124, %p125
      %p127 = scmp.ne.s32.totalorder %s113, %s114
      %p128 = scmp.eq.s32.totalorder %s22, 1
      %p129 = por %p127, %p128
      %p131 = scmp.ne.s32.totalorder %s114, %s130
      %p132 = scmp.eq.s32.totalorder %s22, 0
      %p133 = por %p131, %p132
      %p134 = scmp.le.s32.totalorder 1, %s16
      %p135 = scmp.lt.s32.totalorder %s16, 3
      %p136 = pnand %p134, %p135
      %p137 = pneg %p136
      // Predicated region
      $region9: #{tpu_custom_call.1} parent=5 // pred_check
        _
      $region10: #{tpu_custom_call.1} parent=5 // pred_check_branch
        %139 = sbr.rel (%p136) target = $region12
      $region11: #{tpu_custom_call.1} parent=5 // pred_region
        %s140 = ssub.s32 %s16, 1
        // Predicated region
        $region13: #{tpu_custom_call.1} parent=11 // pred_check
          %p141 = pneg %p77
        $region14: #{tpu_custom_call.1} parent=11 // pred_check_branch
          %143 = sbr.rel (%p141) target = $region16
        $region15: #{tpu_custom_call.1} parent=11 // pred_region
          %s145 = ssub.s32 512, 512
          %146 = vsyncadd [#allocation6], %s145
          %s147 = sshll.u32 [#allocation5], 4
          %s148 = int_to_ptr.vmem [resolvable:$true] %s147
          %153 = dma.hbm_to_vmem [thread:$0]  %s1, 512, %s148, [#allocation6], 128, 128, 8
        $region16: #{tpu_custom_call.1} parent=11 // pred_fallthru
          _
        // Predicated region
        $region17: #{tpu_custom_call.1} parent=11 // pred_check
          %p154 = pneg %p98
        $region18: #{tpu_custom_call.1} parent=11 // pred_check_branch
          %156 = sbr.rel (%p154) target = $region20
        $region19: #{tpu_custom_call.1} parent=11 // pred_region
          _
        $region20: #{tpu_custom_call.1} parent=11 // pred_fallthru
          _
      $region12: #{tpu_custom_call.1} parent=5 // pred_fallthru
        _
      %p157 = scmp.lt.s32.totalorder %s16, 2
      // Predicated region
      $region21: #{tpu_custom_call.1} parent=5 // pred_check
        %p158 = pneg %p157
      $region22: #{tpu_custom_call.1} parent=5 // pred_check_branch
        %160 = sbr.rel (%p158) target = $region24
      $region23: #{tpu_custom_call.1} parent=5 // pred_region
        // Predicated region
        $region25: #{tpu_custom_call.1} parent=23 // pred_check
          %p161 = pneg %p50
        $region26: #{tpu_custom_call.1} parent=23 // pred_check_branch
          %163 = sbr.rel (%p161) target = $region28
        $region27: #{tpu_custom_call.1} parent=23 // pred_region
          %s164 = sand.u32 %s40, 1
          %s165 = scalar_lea.sflag [#allocation3], %s164
          %s166 = sand.u32 %s40, 1
          %s167 = smul.addr %s166, 8
          %s168 = scalar_lea.vmem [#allocation2], %s167
          %s170 = ssub.s32 128, 128
          %171 = vsyncadd %s165, %s170
          %s172 = sadd.s32 %s24, %s23
          %s173 = smul.addr %s172, 128
          %s174 = scalar_lea.hbm %s0, %s173
          %s176 = sshll.u32 %s168, 4
          %s177 = int_to_ptr.vmem [resolvable:$true] %s176
          %179 = dma.hbm_to_vmem [thread:$0]  %s174, 128, %s177, %s165
        $region28: #{tpu_custom_call.1} parent=23 // pred_fallthru
          _
      $region24: #{tpu_custom_call.1} parent=5 // pred_fallthru
        _
      %p180 = scmp.le.s32.totalorder 1, %s16
      %p181 = scmp.lt.s32.totalorder %s16, 3
      %p182 = pnand %p180, %p181
      %p183 = pneg %p182
      // Predicated region
      $region29: #{tpu_custom_call.1} parent=5 // pred_check
        _
      $region30: #{tpu_custom_call.1} parent=5 // pred_check_branch
        %185 = sbr.rel (%p182) target = $region32
      $region31: #{tpu_custom_call.1} parent=5 // pred_region
        %s186 = ssub.s32 %s16, 1
        %s187 = sand.u32 %s43, 1
        %s188 = scalar_lea.sflag [#allocation3], %s187
        %s189 = sand.u32 %s43, 1
        %s190 = smul.addr %s189, 8
        %s191 = scalar_lea.vmem [#allocation2], %s190
        // Predicated region
        $region33: #{tpu_custom_call.1} parent=31 // pred_check
          %p192 = pneg %p56
        $region34: #{tpu_custom_call.1} parent=31 // pred_check_branch
          %194 = sbr.rel (%p192) target = $region36
        $region35: #{tpu_custom_call.1} parent=31 // pred_region
          %195 = dma.done %s188, 128
        $region36: #{tpu_custom_call.1} parent=31 // pred_fallthru
          _
        // Predicated region
        $region37: #{tpu_custom_call.1} parent=31 // pred_check
          %p196 = pneg %p77
        $region38: #{tpu_custom_call.1} parent=31 // pred_check_branch
          %198 = sbr.rel (%p196) target = $region40
        $region39: #{tpu_custom_call.1} parent=31 // pred_region
          %199 = dma.done [#allocation6], 512
        $region40: #{tpu_custom_call.1} parent=31 // pred_fallthru
          _
        %s200 = sand.u32 %s43, 1
        %s201 = scalar_lea.sflag [#allocation3], %s200
        %s202 = sand.u32 %s43, 1
        %s203 = smul.addr %s202, 8
        %s204 = scalar_lea.vmem [#allocation2], %s203
        %p205 = pneg %p56
        %p206 = pneg %p53
        %p207 = pneg %p77
        %p208 = pneg %p74
        %p209 = pneg %p98
        %p210 = pneg %p95
        %p211 = pneg %p126
        %p212 = pneg %p123
        %s213 = sand.u32 %s113, 1
        %s214 = scalar_lea.sflag [#allocation4], %s213
        %s215 = sand.u32 %s113, 1
        %s216 = smul.addr %s215, 4
        %s217 = scalar_lea.vmem [#allocation7], %s216
        %v219 = vld [vmem:[%s191] sm:$0xff]
        %v220 = vpack.c.bf16 %v219, %v219
        %v221 = vld [vmem:[#allocation5] sm:$0xff]
        %v222 = vld [vmem:[#allocation5 + $0x8] sm:$0xff]
        %v223 = vld [vmem:[#allocation5 + $0x10] sm:$0xff]
        %v224 = vld [vmem:[#allocation5 + $0x18] sm:$0xff]
        %v225 = vpack.c.bf16 %v222, %v221
        %v226 = vpack.c.bf16 %v224, %v223
        %v227 = vld [vmem:[%s2] sm:$0x1]
        %v229 = vlaneseq
        %v230 = vshrl.u32 %v229, 7
        %v231 = vsub.s32 0, %v230
        %v232 = vrot.slane %v227, %v231
        %vm234 = vcmask 261120
        %v236 = vsel %vm234, %v220, 0
        %238 = vmatprep.subr.bf16.mxu0 0
        %239 = vmatpush1.bf16.msra.mxu0 %v225
        %240 = vmatprep.subr.bf16.mxu0 0
        %241 = vmatpush1.bf16.msra.mxu0 %v226
        %242 = vmatprep.subr.bf16.mxu0 0
        %243 = vmatpush1.bf16.msra.mxu0 0
        %244 = vmatprep.subr.bf16.mxu0 0
        %245 = vmatpush1.bf16.msra.mxu0 0
        %246 = vmatprep.subr.bf16.mxu0 0
        %247 = vmatpush1.bf16.msra.mxu0 0
        %248 = vmatprep.subr.bf16.mxu0 0
        %249 = vmatpush1.bf16.msra.mxu0 0
        %250 = vmatprep.subr.bf16.mxu0 0
        %251 = vmatpush1.bf16.msra.mxu0 0
        %252 = vmatprep.subr.bf16.mxu0 0
        %253 = vmatpush1.bf16.msra.mxu0 0
        %254 = vmatprep.subr.bf16.mxu0 0
        %255 = vmatpush1.bf16.msra.mxu0 0
        %256 = vmatprep.subr.bf16.mxu0 0
        %257 = vmatpush1.bf16.msra.mxu0 0
        %258 = vmatprep.subr.bf16.mxu0 0
        %259 = vmatpush1.bf16.msra.mxu0 0
        %260 = vmatprep.subr.bf16.mxu0 0
        %261 = vmatpush1.bf16.msra.mxu0 0
        %262 = vmatprep.subr.bf16.mxu0 0
        %263 = vmatpush1.bf16.msra.mxu0 0
        %264 = vmatprep.subr.bf16.mxu0 0
        %265 = vmatpush1.bf16.msra.mxu0 0
        %266 = vmatprep.subr.bf16.mxu0 0
        %267 = vmatpush1.bf16.msra.mxu0 0
        %268 = vmatprep.subr.bf16.mxu0 0
        %269 = vmatpush1.bf16.msra.mxu0 0
        %270 = vmatprep.mubr.bf16.mxu0 0
        %271 = vmatmul.mubr.bf16.gmra.mrb[0].mxu0 %v236
        %v272 = vpop.f32.mrb[0].mxu0
        %v273 = vadd.f32 %v232, %v272
        %v274 = vpop.f32.mrb[0].mxu0
        %v275 = vpop.f32.mrb[0].mxu0
        %v276 = vpop.f32.mrb[0].mxu0
        %277 = vdwg.mxu0
        %v278 = vpack.c.bf16 %v273, %v273
        %vm279 = vcmask 257024
        %280 = vst.msk [vmem:[%s217] sm:$0xf] %vm279, %v278
        %s281 = sand.u32 %s113, 1
        %s282 = scalar_lea.sflag [#allocation4], %s281
        %s283 = sand.u32 %s113, 1
        %s284 = smul.addr %s283, 4
        %s285 = scalar_lea.vmem [#allocation7], %s284
        // Predicated region
        $region41: #{tpu_custom_call.1} parent=31 // pred_check
          %p286 = pneg %p123
        $region42: #{tpu_custom_call.1} parent=31 // pred_check_branch
          %288 = sbr.rel (%p286) target = $region44
        $region43: #{tpu_custom_call.1} parent=31 // pred_region
          %s290 = ssub.s32 64, 64
          %291 = vsyncadd %s282, %s290
          %s292 = sadd.s32 %s26, %s25
          %s293 = smul.addr %s292, 64
          %s294 = scalar_lea.hbm %s3, %s293
          %s296 = sshll.u32 %s285, 4
          %s297 = int_to_ptr.vmem [resolvable:$true] %s296
          %299 = dma.vmem_to_hbm [thread:$0]  %s297, 64, %s294, %s282
        $region44: #{tpu_custom_call.1} parent=31 // pred_fallthru
          _
      $region32: #{tpu_custom_call.1} parent=5 // pred_fallthru
        _
      %p300 = scmp.le.s32.totalorder 2, %s16
      // Predicated region
      $region45: #{tpu_custom_call.1} parent=5 // pred_check
        %p301 = pneg %p300
      $region46: #{tpu_custom_call.1} parent=5 // pred_check_branch
        %303 = sbr.rel (%p301) target = $region48
      $region47: #{tpu_custom_call.1} parent=5 // pred_region
        %s304 = ssub.s32 %s16, 2
        // Predicated region
        $region49: #{tpu_custom_call.1} parent=47 // pred_check
          %p305 = pneg %p129
        $region50: #{tpu_custom_call.1} parent=47 // pred_check_branch
          %307 = sbr.rel (%p305) target = $region52
        $region51: #{tpu_custom_call.1} parent=47 // pred_region
          %s308 = sand.u32 %s114, 1
          %s309 = scalar_lea.sflag [#allocation4], %s308
          %s310 = sand.u32 %s114, 1
          %s311 = smul.addr %s310, 4
          %s312 = scalar_lea.vmem [#allocation7], %s311
          %313 = dma.done %s309, 64
        $region52: #{tpu_custom_call.1} parent=47 // pred_fallthru
          _
      $region48: #{tpu_custom_call.1} parent=5 // pred_fallthru
        _
    $region6: #{tpu_custom_call.1} parent=1 // loop_footer
      %s20 = sadd.s32 1, %s16
    $region7: #{tpu_custom_call.1} parent=1 // loop_footer_branch
      %15 = sbr.rel target = $region3
    $region8: #{tpu_custom_call.1} parent=1 // loop_exit
      _
    %314 = vsyncpa [#allocation3], 1
    %s315 = scalar_lea.sflag [#allocation3], 1
    %316 = vsyncpa %s315, 1
    %317 = vsyncpa [#allocation6], 1
    %318 = vsyncpa [#allocation4], 1
    %s319 = scalar_lea.sflag [#allocation4], 1
    %320 = vsyncpa %s319, 1

</llo_original>
